<compile_context>
chip_gen: v5e
topology: v5e:2x2
jax: 0.10.0
libtpu: 0.0.40
codegen_flags: <defaults>
</compile_context>

<pallas_src>
import jax
import jax.numpy as jnp
from jax.experimental import pallas as pl
from jax.experimental.pallas import tpu as pltpu


# --------------------------------------------------------------------------- #
# Helpers
# --------------------------------------------------------------------------- #
def _round_up(x, m):
    return ((x + m - 1) // m) * m


def _device_kind():
    try:
        return jax.devices()[0].device_kind.lower()
    except Exception:
        return ""


def _tpu_defaults():
    """Returns (tm_default, th_default, vmem_capacity_bytes, device_kind)."""
    kind = _device_kind()
    if "v6" in kind:
        tm, th = 1024, 512          # v6e: 128 MiB VMEM, ridge ~650 FLOP/B
    else:
        tm, th = 512, 512           # v5e / v7x / unknown: smaller footprint
    cap = None
    try:
        cap = int(pltpu.get_tpu_info().vmem_capacity_bytes)
    except Exception:
        cap = None
    if not cap or cap <= 0:
        cap = 64 << 20              # conservative fallback (fits every gen)
    if "v7" in kind:
        cap = min(cap, 64 << 20)    # 64 MiB per TensorCore on v7x
    return tm, th, min(cap, 128 << 20), kind


def _vmem_bytes(tm, th, td, D, x_item, w_item, o_item):
    """Rough double-buffered working-set size for one grid step."""
    return (2 * tm * D * x_item            # x tiles
            + 2 * D * (2 * th) * w_item    # [w1|w3] tiles
            + 2 * th * td * w_item         # w2^T tiles
            + 2 * tm * td * o_item         # output tiles
            + tm * td * 4                  # f32 accumulator scratch
            + 3 * tm * th * 4)             # f32 h / gated intermediates


# --------------------------------------------------------------------------- #
# Kernel
# --------------------------------------------------------------------------- #
def _ffn_kernel(x_ref, w13_ref, w2_ref, o_ref, acc_ref):
    # Grid: (m_tile i, d_tile d, h_tile j) -- j ("arbitrary") is innermost.
    # x_ref  : (TM, D)       token tile (re-used across d and j)
    # w13_ref: (D, 2*TH)     contiguous [w1_j | w3_j] tile (leading dim squeezed)
    # w2_ref : (TH, TD)      w2^T tile (j, d)
    # o_ref  : (TM, TD)      output tile, written on the last H step
    # acc_ref: (TM, TD) f32  VMEM accumulator across the H axis
    j = pl.program_id(2)

    @pl.when(j == 0)
    def _init():
        acc_ref[...] = jnp.zeros_like(acc_ref)

    cdt = w13_ref.dtype
    x = x_ref[...].astype(cdt)          # cast on the VPU, hidden under MXU
    th = w2_ref.shape[0]

    # One fused MXU dot for both the gate (w1) and up (w3) projections.
    h = jnp.dot(x, w13_ref[...], preferred_element_type=jnp.float32)  # (TM, 2*TH)
    h1 = h[:, :th]                       # TH is a multiple of 128 -> lane-aligned views
    h3 = h[:, th:]

    # SiLU(h1) * h3 in the f32 domain (exact F.silu semantics).
    gated = (h1 * jax.nn.sigmoid(h1)) * h3

    acc_ref[...] += jnp.dot(gated.astype(cdt), w2_ref[...],
                            preferred_element_type=jnp.float32)

    @pl.when(j == pl.num_programs(2) - 1)
    def _finalize():
        o_ref[...] = acc_ref[...].astype(o_ref.dtype)


# --------------------------------------------------------------------------- #
# Weight preparation (one time, outside the hot path)
# --------------------------------------------------------------------------- #
def prepare_ffn_weights(w1, w2, w3, *, th=None, dtype=jnp.bfloat16):
    """w1, w3: (H, D); w2: (D, H) in PyTorch nn.Linear layout.

    Returns:
      w13: (nh, D, 2*TH)  tile-major, per-tile [w1_j | w3_j] (transposed, contiguous)
      w2t: (Hp, D)        w2 transposed, H zero-padded to a multiple of TH
      th : H tile size used by the kernel grid
    """
    H, D = w1.shape
    if dtype is not None:
        w1 = w1.astype(dtype)
        w2 = w2.astype(dtype)
        w3 = w3.astype(dtype)

    if th is None:
        _, th_default, _, _ = _tpu_defaults()
        th = min(th_default, _round_up(H, 128))
    th = max(128, (th // 128) * 128)         # enforce lane alignment of the gate/up split
    assert th % 128 == 0

    Hp = _round_up(H, th)                     # pad H -> zero contribution, keeps TH large
    if Hp != H:
        w1 = jnp.pad(w1, ((0, Hp - H), (0, 0)))
        w3 = jnp.pad(w3, ((0, Hp - H), (0, 0)))
        w2 = jnp.pad(w2, ((0, 0), (0, Hp - H)))

    nh = Hp // th
    w1t = w1.T.reshape(D, nh, th)
    w3t = w3.T.reshape(D, nh, th)
    w13 = jnp.concatenate([w1t, w3t], axis=2)          # (D, nh, 2*th): [w1_j | w3_j]
    w13 = jnp.transpose(w13, (1, 0, 2))                # (nh, D, 2*th), tile-major contiguous
    return {"w13": w13, "w2t": w2.T, "th": th, "hidden_dim": H}


# --------------------------------------------------------------------------- #
# Forward wrapper
# --------------------------------------------------------------------------- #
def feed_forward(x, params, *, tm=None, nd=None, vmem_limit_bytes=None):
    """x: (B, S, D). params from prepare_ffn_weights. Output dtype follows x."""
    w13, w2t, th = params["w13"], params["w2t"], params["th"]
    nh, D, two_th = w13.shape
    Hp = w2t.shape[0]
    assert two_th == 2 * th and Hp == nh * th

    tm_default, _, vmem_cap, kind = _tpu_defaults()
    if tm is None:
        tm = tm_default

    B, S, _ = x.shape
    M = B * S
    x2d = x.reshape(M, D)                      # no wrapper-side astype: cast in-kernel

    out_dtype = x.dtype
    compute_dtype = w13.dtype
    x_item = jnp.dtype(x.dtype).itemsize
    w_item = jnp.dtype(compute_dtype).itemsize
    o_item = jnp.dtype(out_dtype).itemsize

    sub_mult = 16 if x_item == 2 else 8
    m_round = _round_up(M, sub_mult)
    tm_eff = max(sub_mult, (min(tm, m_round) // sub_mult) * sub_mult)

    # Output-D split: feeds both TensorCores on v7x for decode-shaped calls.
    if nd is None:
        grid_m_guess = pl.cdiv(m_round, tm_eff)
        nd = 2 if (grid_m_guess == 1 and "v7" in kind and D % 256 == 0) else 1
    if nd < 1 or D % nd != 0 or (D // nd) % 128 != 0:
        nd = 1
    td = D // nd

    # Fit the working set inside physical VMEM (leave headroom); shrink TM if needed.
    budget = max(vmem_cap - (8 << 20), 16 << 20)
    while (_vmem_bytes(tm_eff, th, td, D, x_item, w_item, o_item) > budget
           and tm_eff > sub_mult):
        tm_eff = max(sub_mult, (tm_eff // 2 // sub_mult) * sub_mult)

    mp = _round_up(M, tm_eff)
    if mp != M:
        x2d = jnp.pad(x2d, ((0, mp - M), (0, 0)))
    grid_m = mp // tm_eff
    grid = (grid_m, nd, nh)

    needed = _vmem_bytes(tm_eff, th, td, D, x_item, w_item, o_item)
    if vmem_limit_bytes is None:
        vmem_limit_bytes = int(min(max(int(1.25 * needed) + (4 << 20), 32 << 20),
                                   vmem_cap))

    # Weights are re-streamed once per M tile (and once per D slab for w13).
    cost = pl.CostEstimate(
        flops=6 * mp * D * Hp,                          # 2*M*D*2H + 2*M*H*D
        transcendentals=mp * Hp * nd,                   # sigmoid
        bytes_accessed=int(M * D * x_item + mp * D * o_item
                           + w13.size * w_item * grid_m * nd
                           + w2t.size * w_item * grid_m),
    )

    out2d = pl.pallas_call(
        _ffn_kernel,
        out_shape=jax.ShapeDtypeStruct((mp, D), out_dtype),
        grid_spec=pltpu.PrefetchScalarGridSpec(
            num_scalar_prefetch=0,
            grid=grid,
            in_specs=[
                pl.BlockSpec((tm_eff, D), lambda i, d, j: (i, 0)),        # x tile
                pl.BlockSpec((None, D, 2 * th), lambda i, d, j: (j, 0, 0)),  # [w1|w3] tile
                pl.BlockSpec((th, td), lambda i, d, j: (j, d)),           # w2^T tile
            ],
            out_specs=pl.BlockSpec((tm_eff, td), lambda i, d, j: (i, d)),
            scratch_shapes=[pltpu.VMEM((tm_eff, td), jnp.float32)],
        ),
        compiler_params=pltpu.CompilerParams(
            dimension_semantics=("parallel", "parallel", "arbitrary"),
            vmem_limit_bytes=vmem_limit_bytes,
        ),
        cost_estimate=cost,
    )(x2d, w13, w2t)

    return out2d[:M].reshape(B, S, D)


# --------------------------------------------------------------------------- #
# Reference & test
# --------------------------------------------------------------------------- #
def _reference(x, w1, w2, w3):
    h1 = x @ w1.T
    h3 = x @ w3.T
    gated = (h1 * jax.nn.sigmoid(h1)) * h3
    return gated @ w2.T


if __name__ == "__main__":
    # Module hyperparameters (small but TPU-tile-friendly).
    dim = 256
    hidden_dim_arg = 512
    multiple_of = 128

    # Same hidden_dim arithmetic as the PyTorch __init__:
    hidden_dim = int(2 * hidden_dim_arg / 3)                              # 341
    hidden_dim = multiple_of * ((hidden_dim + multiple_of - 1) // multiple_of)  # 384

    batch, seq = 3, 5   # M = 15 -> exercises the M-padding path

    key = jax.random.PRNGKey(0)
    kx, k1, k2, k3 = jax.random.split(key, 4)

    x = jax.random.normal(kx, (batch, seq, dim), dtype=jnp.float32)
    # nn.Linear weight layout: (out_features, in_features)
    w1 = jax.random.normal(k1, (hidden_dim, dim), dtype=jnp.float32) * 0.02
    w2 = jax.random.normal(k2, (dim, hidden_dim), dtype=jnp.float32) * 0.02
    w3 = jax.random.normal(k3, (hidden_dim, dim), dtype=jnp.float32) * 0.02

    ref = _reference(x, w1, w2, w3)

    # ---- f32 path: th=256 forces H padding (384 -> 512) and a 2-step H
    #      reduction; tm=8 forces grid_m=2 (multi M-tile) plus M padding. -----
    params_f32 = prepare_ffn_weights(w1, w2, w3, th=256, dtype=jnp.float32)
    out = feed_forward(x, params_f32, tm=8)
    jax.block_until_ready(out)
    assert out.shape == (batch, seq, dim)
    assert jnp.allclose(out, ref, atol=5e-4, rtol=5e-4), "f32 mismatch vs reference"

    # ---- bf16 compute path (default), nd=2 output-D split (v7x decode shape),
    #      f32 accumulation; looser tolerance. --------------------------------
    params_bf16 = prepare_ffn_weights(w1, w2, w3)           # default bf16, default th
    out_bf16 = feed_forward(x, params_bf16, nd=2)
    jax.block_until_ready(out_bf16)
    assert out_bf16.shape == (batch, seq, dim)
    assert jnp.allclose(out_bf16.astype(jnp.float32), ref, atol=1e-2, rtol=5e-2), \
        "bf16 mismatch vs reference"

    # ---- fully-default call (device-tuned TM/TH, auto nd) --------------------
    out_def = feed_forward(x, params_bf16)
    jax.block_until_ready(out_def)
    assert jnp.allclose(out_def.astype(jnp.float32), ref, atol=1e-2, rtol=5e-2), \
        "default-config mismatch vs reference"

    print("KERNEL_OK")
</pallas_src>

<mosaic_0001>
module attributes {stable_mosaic.version = 11 : i64} {
  func.func @_ffn_kernel(%arg0: i32, %arg1: i32, %arg2: i32, %arg3: memref<8x256xf32, #tpu.memory_space<vmem>>, %arg4: memref<1x256x512xf32, #tpu.memory_space<vmem>>, %arg5: memref<256x256xf32, #tpu.memory_space<vmem>>, %arg6: memref<8x256xf32, #tpu.memory_space<vmem>>, %arg7: memref<8x256xf32, #tpu.memory_space<vmem>>) attributes {dimension_semantics = [#tpu.dimension_semantics<parallel>, #tpu.dimension_semantics<parallel>, #tpu.dimension_semantics<arbitrary>], iteration_bounds = array<i64: 2, 1, 2>, scalar_prefetch = 0 : i64, scratch_operands = 1 : i64, tpu.core_type = #tpu.core_type<tc>, window_params = [{transform_indices = @transform_0, window_bounds = array<i64: 8, 256>}, {transform_indices = @transform_1, window_bounds = array<i64: 1, 256, 512>}, {transform_indices = @transform_2, window_bounds = array<i64: 256, 256>}, {transform_indices = @transform_3, window_bounds = array<i64: 8, 256>}]} {
    %c0_i32 = arith.constant 0 : i32
    %0 = arith.cmpi eq, %arg2, %c0_i32 : i32
    %1 = arith.extui %0 : i1 to i32
    %c0_i32_0 = arith.constant 0 : i32
    %2 = arith.cmpi ne, %1, %c0_i32_0 : i32
    scf.if %2 {
      %cst_14 = arith.constant 0.000000e+00 : f32
      %24 = vector.broadcast %cst_14 : f32 to vector<8x256xf32>
      %c0_15 = arith.constant 0 : index
      %c0_16 = arith.constant 0 : index
      %25 = vector.load %arg7[%c0_15, %c0_16] : memref<8x256xf32, #tpu.memory_space<vmem>>, vector<8x256xf32>
      tpu.vector_store %arg7[%c0_15, %c0_16], %24 {strides = array<i32>} : memref<8x256xf32, #tpu.memory_space<vmem>>, vector<8x256xf32>,
    } else {
    }
    %c0 = arith.constant 0 : index
    %c0_1 = arith.constant 0 : index
    %3 = vector.load %arg3[%c0, %c0_1] : memref<8x256xf32, #tpu.memory_space<vmem>>, vector<8x256xf32>
    %c0_2 = arith.constant 0 : index
    %c0_3 = arith.constant 0 : index
    %c0_4 = arith.constant 0 : index
    %4 = vector.load %arg4[%c0_2, %c0_3, %c0_4] : memref<1x256x512xf32, #tpu.memory_space<vmem>>, vector<1x256x512xf32>
    %5 = vector.shape_cast %4 : vector<1x256x512xf32> to vector<256x512xf32>
    %cst = arith.constant dense<0.000000e+00> : vector<8x512xf32>
    %6 = tpu.matmul %3, %5, %cst {dimension_numbers = #tpu.dot_dimension_numbers<[1], [0], [0], [1], [0, 0, 1, 1], [], []>} : vector<8x256xf32>, vector<256x512xf32>, vector<8x512xf32> -> vector<8x512xf32>
    %7 = vector.extract_strided_slice %6 {offsets = [0, 0], sizes = [8, 256], strides = [1, 1]} : vector<8x512xf32> to vector<8x256xf32>
    %8 = vector.extract_strided_slice %6 {offsets = [0, 256], sizes = [8, 256], strides = [1, 1]} : vector<8x512xf32> to vector<8x256xf32>
    %9 = arith.negf %7 : vector<8x256xf32>
    %10 = math.exp %9 : vector<8x256xf32>
    %cst_5 = arith.constant 1.000000e+00 : f32
    %11 = vector.broadcast %cst_5 : f32 to vector<8x256xf32>
    %12 = arith.addf %11, %10 : vector<8x256xf32>
    %13 = arith.divf %11, %12 : vector<8x256xf32>
    %14 = arith.mulf %7, %13 : vector<8x256xf32>
    %15 = arith.mulf %14, %8 : vector<8x256xf32>
    %c0_6 = arith.constant 0 : index
    %c0_7 = arith.constant 0 : index
    %16 = vector.load %arg7[%c0_6, %c0_7] : memref<8x256xf32, #tpu.memory_space<vmem>>, vector<8x256xf32>
    %c0_8 = arith.constant 0 : index
    %c0_9 = arith.constant 0 : index
    %17 = vector.load %arg5[%c0_8, %c0_9] : memref<256x256xf32, #tpu.memory_space<vmem>>, vector<256x256xf32>
    %cst_10 = arith.constant dense<0.000000e+00> : vector<8x256xf32>
    %18 = tpu.matmul %15, %17, %cst_10 {dimension_numbers = #tpu.dot_dimension_numbers<[1], [0], [0], [1], [0, 0, 1, 1], [], []>} : vector<8x256xf32>, vector<256x256xf32>, vector<8x256xf32> -> vector<8x256xf32>
    %19 = arith.addf %16, %18 : vector<8x256xf32>
    %c0_11 = arith.constant 0 : index
    %c0_12 = arith.constant 0 : index
    %20 = vector.load %arg7[%c0_11, %c0_12] : memref<8x256xf32, #tpu.memory_space<vmem>>, vector<8x256xf32>
    tpu.vector_store %arg7[%c0_11, %c0_12], %19 {strides = array<i32>} : memref<8x256xf32, #tpu.memory_space<vmem>>, vector<8x256xf32>,
    %c1_i32 = arith.constant 1 : i32
    %21 = arith.cmpi eq, %arg2, %c1_i32 : i32
    %22 = arith.extui %21 : i1 to i32
    %c0_i32_13 = arith.constant 0 : i32
    %23 = arith.cmpi ne, %22, %c0_i32_13 : i32
    scf.if %23 {
      %c0_14 = arith.constant 0 : index
      %c0_15 = arith.constant 0 : index
      %24 = vector.load %arg7[%c0_14, %c0_15] : memref<8x256xf32, #tpu.memory_space<vmem>>, vector<8x256xf32>
      %c0_16 = arith.constant 0 : index
      %c0_17 = arith.constant 0 : index
      %25 = vector.load %arg6[%c0_16, %c0_17] : memref<8x256xf32, #tpu.memory_space<vmem>>, vector<8x256xf32>
      tpu.vector_store %arg6[%c0_16, %c0_17], %24 {strides = array<i32>} : memref<8x256xf32, #tpu.memory_space<vmem>>, vector<8x256xf32>,
    } else {
    }
    return
  }
  func.func @transform_0(%arg0: i32, %arg1: i32, %arg2: i32) -> (i32, i32) {
    %c0_i32 = arith.constant 0 : i32
    %c0_i32_0 = arith.constant 0 : i32
    return %arg0, %c0_i32 : i32, i32
  }
  func.func @transform_1(%arg0: i32, %arg1: i32, %arg2: i32) -> (i32, i32, i32) {
    %c0_i32 = arith.constant 0 : i32
    %c0_i32_0 = arith.constant 0 : i32
    %c0_i32_1 = arith.constant 0 : i32
    return %arg2, %c0_i32, %c0_i32_0 : i32, i32, i32
  }
  func.func @transform_2(%arg0: i32, %arg1: i32, %arg2: i32) -> (i32, i32) {
    %c0_i32 = arith.constant 0 : i32
    return %arg2, %arg1 : i32, i32
  }
  func.func @transform_3(%arg0: i32, %arg1: i32, %arg2: i32) -> (i32, i32) {
    %c0_i32 = arith.constant 0 : i32
    return %arg0, %arg1 : i32, i32
  }
}

</mosaic_0001>

<llo_original>
// kernel: tpu_custom_call.1
$region0: #{tpu_custom_call.1}
  #allocation0 [shape = 'u32[]', space=smem, size = 0x4, offset = 0x4, fixed_abs, tag = 'smem constant byte address 0x4 - core index']
  #allocation1 [shape = 'u32[72,128]{1,0:T(1,128)}', space=vmem, size = 0x9000, scoped, tag = 'internal scratch']
  #allocation2 [shape = 'f32[8,256]{1,0:T(8,128)}', space=vmem, size = 0x2000, scoped, tag = 'scratch operand']
  %s0 = inlined_call_operand.hbm [shape: f32[16,256], index: 0, kind: input, shape index: {}]
  %s1 = inlined_call_operand.hbm [shape: f32[2,256,512], index: 1, kind: input, shape index: {}]
  %s2 = inlined_call_operand.hbm [shape: f32[512,256], index: 2, kind: input, shape index: {}]
  %s3 = inlined_call_operand.hbm [shape: f32[16,256], index: 3, kind: output, shape index: {}]
  %s4 = sld [smem:[#allocation0]]
  $region65: #{tpu_custom_call.1} parent=0
    _
  %s6 = ssub.s32 1, %s4
  %s7 = scalar_select 0, %s6, %s4
  $region1: #{tpu_custom_call.1} parent=0
    #allocation3 [shape = 'u8[16384]{0}', space=vmem, size = 0x4000, scoped, tag = 'input window, operand 0']
    #allocation4 [shape = 's32[2]{0}', space=sflag, size = 0x8, scoped, tag = 'scoped memory for tpu_custom_call.1']
    #allocation5 [shape = 's32[2]{0}', space=sflag, size = 0x8, scoped, tag = 'scoped memory for tpu_custom_call.1']
    #allocation6 [shape = 'u8[1048576]{0}', space=vmem, size = 0x100000, scoped, tag = 'input window, operand 1']
    #allocation7 [shape = 's32[2]{0}', space=sflag, size = 0x8, scoped, tag = 'scoped memory for tpu_custom_call.1']
    #allocation8 [shape = 'u8[524288]{0}', space=vmem, size = 0x80000, scoped, tag = 'input window, operand 2']
    #allocation9 [shape = 'u8[16384]{0}', space=vmem, size = 0x4000, scoped, tag = 'output window, operand 0']
    %8 = vsyncpa [#allocation4], 0
    %s9 = scalar_lea.sflag [#allocation4], 1
    %10 = vsyncpa %s9, 0
    %11 = vsyncpa [#allocation7], 0
    %s12 = scalar_lea.sflag [#allocation7], 1
    %13 = vsyncpa %s12, 0
    %14 = vsyncpa [#allocation5], 0
    %s15 = scalar_lea.sflag [#allocation5], 1
    %16 = vsyncpa %s15, 0
    loop: start=0, step=1, limit=6
    $region2: #{tpu_custom_call.1} parent=1 // loop_pre_header
      _
    $region3: #{tpu_custom_call.1} parent=1 // loop_header
      %s18 = sphi 0, %s22
      %p19 = scmp.ge.s32.totalorder %s18, 6
      %s25 = sphi 0, %s44
      %s26 = sphi 0, %s40
      %s27 = sphi 0, %s36
      %s28 = sphi 0, %s25
      %s29 = sphi 0, %s26
      %s30 = sphi 0, %s27
      %s31 = sphi 0, %s28
      %s32 = sphi 0, %s29
      %s33 = sphi 0, %s30
      %s47 = sphi 0, %s49
      %s50 = sphi 0, %s47
      %s51 = sphi 0, %s50
      %s67 = sphi 0, %s51
      %s73 = sphi 0, %s75
      %s76 = sphi 0, %s73
      %s77 = sphi 0, %s76
      %s93 = sphi 0, %s77
      %s101 = sphi 0, %s103
      %s104 = sphi 0, %s101
      %s105 = sphi 0, %s104
      %s121 = sphi 0, %s105
      %s129 = sphi 0, %s131
      %s132 = sphi 0, %s129
      %s133 = sphi 0, %s132
      %s149 = sphi 0, %s133
    $region4: #{tpu_custom_call.1} parent=1 // loop_header_branch
      %21 = sbr.rel (%p19) target = $region8
    $region5: #{tpu_custom_call.1} parent=1 // loop_body
      %s23 = ssub.s32 %s18, 1
      %s24 = ssub.s32 %s18, 2
      %s34 = sadd.s32 1, %s27
      %p35 = scmp.ge.s32.totalorder %s34, 2
      %s36 = scalar_select %p35, 0, %s34
      %s37 = sadd.s32 1, %s26
      %s38 = scalar_select %p35, %s37, %s26
      %p39 = scmp.ge.s32.totalorder %s38, 1
      %s40 = scalar_select %p39, 0, %s38
      %s41 = sadd.s32 1, %s25
      %s42 = scalar_select %p39, %s41, %s25
      %p43 = scmp.ge.s32.totalorder %s42, 2
      %s44 = scalar_select %p43, 0, %s42
      %s45 = ssub.s32 %s25, %s44
      %p46 = scmp.eq.s32.totalorder %s45, 0
      %s48 = sadd.s32 %s47, 1
      %s49 = scalar_select %p46, %s47, %s48
      %p52 = pneg %p46
      %p53 = scmp.eq.s32.totalorder %s18, 3
      %p54 = por %p52, %p53
      %p55 = scmp.ne.s32.totalorder %s47, %s50
      %p56 = scmp.eq.s32.totalorder %s18, 0
      %p57 = por %p55, %p56
      %p58 = scmp.ne.s32.totalorder %s47, %s50
      %p59 = scmp.eq.s32.totalorder %s23, 3
      %p60 = por %p58, %p59
      %p61 = scmp.ne.s32.totalorder %s50, %s51
      %p62 = scmp.eq.s32.totalorder %s23, 0
      %p63 = por %p61, %p62
      %p64 = scmp.ne.s32.totalorder %s50, %s51
      %p65 = scmp.eq.s32.totalorder %s24, 3
      %p66 = por %p64, %p65
      %p68 = scmp.ne.s32.totalorder %s51, %s67
      %p69 = scmp.eq.s32.totalorder %s24, 0
      %p70 = por %p68, %p69
      %s71 = ssub.s32 %s27, %s36
      %p72 = scmp.eq.s32.totalorder %s71, 0
      %s74 = sadd.s32 %s73, 1
      %s75 = scalar_select %p72, %s73, %s74
      %p78 = pneg %p72
      %p79 = scmp.eq.s32.totalorder %s18, 3
      %p80 = por %p78, %p79
      %p81 = scmp.ne.s32.totalorder %s73, %s76
      %p82 = scmp.eq.s32.totalorder %s18, 0
      %p83 = por %p81, %p82
      %p84 = scmp.ne.s32.totalorder %s73, %s76
      %p85 = scmp.eq.s32.totalorder %s23, 3
      %p86 = por %p84, %p85
      %p87 = scmp.ne.s32.totalorder %s76, %s77
      %p88 = scmp.eq.s32.totalorder %s23, 0
      %p89 = por %p87, %p88
      %p90 = scmp.ne.s32.totalorder %s76, %s77
      %p91 = scmp.eq.s32.totalorder %s24, 3
      %p92 = por %p90, %p91
      %p94 = scmp.ne.s32.totalorder %s77, %s93
      %p95 = scmp.eq.s32.totalorder %s24, 0
      %p96 = por %p94, %p95
      %s97 = ssub.s32 %s27, %s36
      %s98 = ssub.s32 %s26, %s40
      %s99 = sor.u32 %s97, %s98
      %p100 = scmp.eq.s32.totalorder %s99, 0
      %s102 = sadd.s32 %s101, 1
      %s103 = scalar_select %p100, %s101, %s102
      %p106 = pneg %p100
      %p107 = scmp.eq.s32.totalorder %s18, 3
      %p108 = por %p106, %p107
      %p109 = scmp.ne.s32.totalorder %s101, %s104
      %p110 = scmp.eq.s32.totalorder %s18, 0
      %p111 = por %p109, %p110
      %p112 = scmp.ne.s32.totalorder %s101, %s104
      %p113 = scmp.eq.s32.totalorder %s23, 3
      %p114 = por %p112, %p113
      %p115 = scmp.ne.s32.totalorder %s104, %s105
      %p116 = scmp.eq.s32.totalorder %s23, 0
      %p117 = por %p115, %p116
      %p118 = scmp.ne.s32.totalorder %s104, %s105
      %p119 = scmp.eq.s32.totalorder %s24, 3
      %p120 = por %p118, %p119
      %p122 = scmp.ne.s32.totalorder %s105, %s121
      %p123 = scmp.eq.s32.totalorder %s24, 0
      %p124 = por %p122, %p123
      %s125 = ssub.s32 %s25, %s44
      %s126 = ssub.s32 %s26, %s40
      %s127 = sor.u32 %s125, %s126
      %p128 = scmp.eq.s32.totalorder %s127, 0
      %s130 = sadd.s32 %s129, 1
      %s131 = scalar_select %p128, %s129, %s130
      %p134 = pneg %p128
      %p135 = scmp.eq.s32.totalorder %s18, 3
      %p136 = por %p134, %p135
      %p137 = scmp.ne.s32.totalorder %s129, %s132
      %p138 = scmp.eq.s32.totalorder %s18, 0
      %p139 = por %p137, %p138
      %p140 = scmp.ne.s32.totalorder %s129, %s132
      %p141 = scmp.eq.s32.totalorder %s23, 3
      %p142 = por %p140, %p141
      %p143 = scmp.ne.s32.totalorder %s132, %s133
      %p144 = scmp.eq.s32.totalorder %s23, 0
      %p145 = por %p143, %p144
      %p146 = scmp.ne.s32.totalorder %s132, %s133
      %p147 = scmp.eq.s32.totalorder %s24, 3
      %p148 = por %p146, %p147
      %p150 = scmp.ne.s32.totalorder %s133, %s149
      %p151 = scmp.eq.s32.totalorder %s24, 0
      %p152 = por %p150, %p151
      %p153 = scmp.le.s32.totalorder 1, %s18
      %p154 = scmp.lt.s32.totalorder %s18, 5
      %p155 = pnand %p153, %p154
      %p156 = pneg %p155
      // Predicated region
      $region9: #{tpu_custom_call.1} parent=5 // pred_check
        _
      $region10: #{tpu_custom_call.1} parent=5 // pred_check_branch
        %158 = sbr.rel (%p155) target = $region12
      $region11: #{tpu_custom_call.1} parent=5 // pred_region
        %s159 = ssub.s32 %s18, 1
      $region12: #{tpu_custom_call.1} parent=5 // pred_fallthru
        _
      %p160 = scmp.lt.s32.totalorder %s18, 4
      // Predicated region
      $region13: #{tpu_custom_call.1} parent=5 // pred_check
        %p161 = pneg %p160
      $region14: #{tpu_custom_call.1} parent=5 // pred_check_branch
        %163 = sbr.rel (%p161) target = $region16
      $region15: #{tpu_custom_call.1} parent=5 // pred_region
        // Predicated region
        $region17: #{tpu_custom_call.1} parent=15 // pred_check
          %p164 = pneg %p57
        $region18: #{tpu_custom_call.1} parent=15 // pred_check_branch
          %166 = sbr.rel (%p164) target = $region20
        $region19: #{tpu_custom_call.1} parent=15 // pred_region
          %s167 = sand.u32 %s47, 1
          %s168 = scalar_lea.sflag [#allocation4], %s167
          %s169 = sand.u32 %s47, 1
          %s170 = smul.addr %s169, 16
          %s171 = scalar_lea.vmem [#allocation3], %s170
          %173 = vsyncadd %s168, 0
          %s174 = smul.addr %s25, 2
          %s175 = smul.addr %s174, 8
          %s176 = scalar_lea.hbm %s0, %s175
          %s178 = sshll.u32 %s176, 4
          %s179 = int_to_ptr.hbm [resolvable:$true] %s178
          %s180 = sshll.u32 %s171, 4
          %s181 = int_to_ptr.vmem [resolvable:$true] %s180
          %183 = dma.hbm_to_vmem [thread:$0]  %s179, 256, %s181, %s168
        $region20: #{tpu_custom_call.1} parent=15 // pred_fallthru
          _
        // Predicated region
        $region21: #{tpu_custom_call.1} parent=15 // pred_check
          %p184 = pneg %p83
        $region22: #{tpu_custom_call.1} parent=15 // pred_check_branch
          %186 = sbr.rel (%p184) target = $region24
        $region23: #{tpu_custom_call.1} parent=15 // pred_region
          %s187 = sand.u32 %s18, 1
          %s188 = scalar_lea.sflag [#allocation7], %s187
          %s189 = sand.u32 %s73, 1
          %s190 = smul.addr %s189, 1024
          %s191 = scalar_lea.vmem [#allocation6], %s190
          %193 = vsyncadd %s188, 0
          %s194 = smul.addr %s27, 128
          %s195 = smul.addr %s194, 8
          %s196 = scalar_lea.hbm %s1, %s195
          %s197 = sshll.u32 %s196, 4
          %s198 = int_to_ptr.hbm [resolvable:$true] %s197
          %s199 = sshll.u32 %s191, 4
          %s200 = int_to_ptr.vmem [resolvable:$true] %s199
          %205 = dma.hbm_to_vmem [thread:$0]  %s198, 16384, %s200, %s188, 512, 512, 32
        $region24: #{tpu_custom_call.1} parent=15 // pred_fallthru
          _
        // Predicated region
        $region25: #{tpu_custom_call.1} parent=15 // pred_check
          %p206 = pneg %p111
        $region26: #{tpu_custom_call.1} parent=15 // pred_check_branch
          %208 = sbr.rel (%p206) target = $region28
        $region27: #{tpu_custom_call.1} parent=15 // pred_region
          %s209 = sand.u32 %s18, 1
          %s210 = scalar_lea.sflag [#allocation7], %s209
          %s211 = sand.u32 %s101, 1
          %s212 = smul.addr %s211, 512
          %s213 = scalar_lea.vmem [#allocation8], %s212
          %s214 = smul.u32 32, %s27
          %s215 = smul.u32 2, %s26
          %217 = vsyncadd %s210, 0
          %s218 = smul.addr %s214, 2
          %s219 = sadd.s32 %s215, %s218
          %s220 = smul.addr %s219, 8
          %s221 = scalar_lea.hbm %s2, %s220
          %s222 = sshll.u32 %s221, 4
          %s223 = int_to_ptr.hbm [resolvable:$true] %s222
          %s224 = sshll.u32 %s213, 4
          %s225 = int_to_ptr.vmem [resolvable:$true] %s224
          %230 = dma.hbm_to_vmem [thread:$0]  %s223, 8192, %s225, %s210, 256, 256, 16
        $region28: #{tpu_custom_call.1} parent=15 // pred_fallthru
          _
      $region16: #{tpu_custom_call.1} parent=5 // pred_fallthru
        _
      %p231 = scmp.le.s32.totalorder 1, %s18
      %p232 = scmp.lt.s32.totalorder %s18, 5
      %p233 = pnand %p231, %p232
      %p234 = pneg %p233
      // Predicated region
      $region29: #{tpu_custom_call.1} parent=5 // pred_check
        _
      $region30: #{tpu_custom_call.1} parent=5 // pred_check_branch
        %236 = sbr.rel (%p233) target = $region32
      $region31: #{tpu_custom_call.1} parent=5 // pred_region
        %s237 = ssub.s32 %s18, 1
        %s238 = sand.u32 %s50, 1
        %s239 = scalar_lea.sflag [#allocation4], %s238
        %s240 = sand.u32 %s50, 1
        %s241 = smul.addr %s240, 16
        %s242 = scalar_lea.vmem [#allocation3], %s241
        // Predicated region
        $region33: #{tpu_custom_call.1} parent=31 // pred_check
          %p243 = pneg %p63
        $region34: #{tpu_custom_call.1} parent=31 // pred_check_branch
          %245 = sbr.rel (%p243) target = $region36
        $region35: #{tpu_custom_call.1} parent=31 // pred_region
          %247 = dma.done %s239, 256
        $region36: #{tpu_custom_call.1} parent=31 // pred_fallthru
          _
        %s248 = sand.u32 %s23, 1
        %s249 = scalar_lea.sflag [#allocation7], %s248
        %s250 = sand.u32 %s76, 1
        %s251 = smul.addr %s250, 1024
        %s252 = scalar_lea.vmem [#allocation6], %s251
        // Predicated region
        $region37: #{tpu_custom_call.1} parent=31 // pred_check
          %p253 = pneg %p89
        $region38: #{tpu_custom_call.1} parent=31 // pred_check_branch
          %255 = sbr.rel (%p253) target = $region40
        $region39: #{tpu_custom_call.1} parent=31 // pred_region
          %257 = dma.done %s249, 16384
        $region40: #{tpu_custom_call.1} parent=31 // pred_fallthru
          _
        %s258 = sand.u32 %s23, 1
        %s259 = scalar_lea.sflag [#allocation7], %s258
        %s260 = sand.u32 %s104, 1
        %s261 = smul.addr %s260, 512
        %s262 = scalar_lea.vmem [#allocation8], %s261
        // Predicated region
        $region41: #{tpu_custom_call.1} parent=31 // pred_check
          %p263 = pneg %p117
        $region42: #{tpu_custom_call.1} parent=31 // pred_check_branch
          %265 = sbr.rel (%p263) target = $region44
        $region43: #{tpu_custom_call.1} parent=31 // pred_region
          %267 = dma.done %s259, 8192
        $region44: #{tpu_custom_call.1} parent=31 // pred_fallthru
          _
        %s268 = sand.u32 %s50, 1
        %s269 = scalar_lea.sflag [#allocation4], %s268
        %s270 = sand.u32 %s50, 1
        %s271 = smul.addr %s270, 16
        %s272 = scalar_lea.vmem [#allocation3], %s271
        %p273 = pneg %p63
        %p274 = pneg %p60
        %s275 = sand.u32 %s23, 1
        %s276 = scalar_lea.sflag [#allocation7], %s275
        %s277 = sand.u32 %s76, 1
        %s278 = smul.addr %s277, 1024
        %s279 = scalar_lea.vmem [#allocation6], %s278
        %p280 = pneg %p89
        %p281 = pneg %p86
        %s282 = sand.u32 %s23, 1
        %s283 = scalar_lea.sflag [#allocation7], %s282
        %s284 = sand.u32 %s104, 1
        %s285 = smul.addr %s284, 512
        %s286 = scalar_lea.vmem [#allocation8], %s285
        %p287 = pneg %p117
        %p288 = pneg %p114
        %p289 = pneg %p145
        %p290 = pneg %p142
        %s291 = sand.u32 %s132, 1
        %s292 = scalar_lea.sflag [#allocation5], %s291
        %s293 = sand.u32 %s132, 1
        %s294 = smul.addr %s293, 16
        %s295 = scalar_lea.vmem [#allocation9], %s294
        %s296 = smul.u32 32, %s30
        %s297 = smul.u32 2, %s29
        %s298 = smul.u32 2, %s29
        %p299 = scmp.eq.s32.totalorder %s30, 0
        // Predicated region
        $region45: #{tpu_custom_call.1} parent=31 // pred_check
          %p300 = pneg %p299
        $region46: #{tpu_custom_call.1} parent=31 // pred_check_branch
          %302 = sbr.rel (%p300) target = $region48
        $region47: #{tpu_custom_call.1} parent=31 // pred_region
          %303 = vst [vmem:[#allocation2] sm:$0xff] 0.0
          %304 = vst [vmem:[#allocation2 + $0x8] sm:$0xff] 0.0
        $region48: #{tpu_custom_call.1} parent=31 // pred_fallthru
          _
        %v305 = vld [vmem:[%s242] sm:$0xff]
        %v306 = vld [vmem:[%s242 + $0x8] sm:$0xff]
        %v307 = vld [vmem:[%s252] sm:$0xff]
        %v308 = vld [vmem:[%s252 + $0x8] sm:$0xff]
        %v309 = vld [vmem:[%s252 + $0x10] sm:$0xff]
        %v310 = vld [vmem:[%s252 + $0x18] sm:$0xff]
        %v311 = vld [vmem:[%s252 + $0x20] sm:$0xff]
        %v312 = vld [vmem:[%s252 + $0x28] sm:$0xff]
        %v313 = vld [vmem:[%s252 + $0x30] sm:$0xff]
        %v314 = vld [vmem:[%s252 + $0x38] sm:$0xff]
        %v315 = vld [vmem:[%s252 + $0x40] sm:$0xff]
        %v316 = vld [vmem:[%s252 + $0x48] sm:$0xff]
        %v317 = vld [vmem:[%s252 + $0x50] sm:$0xff]
        %v318 = vld [vmem:[%s252 + $0x58] sm:$0xff]
        %v319 = vld [vmem:[%s252 + $0x60] sm:$0xff]
        %v320 = vld [vmem:[%s252 + $0x68] sm:$0xff]
        %v321 = vld [vmem:[%s252 + $0x70] sm:$0xff]
        %v322 = vld [vmem:[%s252 + $0x78] sm:$0xff]
        %v323 = vld [vmem:[%s252 + $0x80] sm:$0xff]
        %v324 = vld [vmem:[%s252 + $0x88] sm:$0xff]
        %v325 = vld [vmem:[%s252 + $0x90] sm:$0xff]
        %v326 = vld [vmem:[%s252 + $0x98] sm:$0xff]
        %v327 = vld [vmem:[%s252 + $0xa0] sm:$0xff]
        %v328 = vld [vmem:[%s252 + $0xa8] sm:$0xff]
        %v329 = vld [vmem:[%s252 + $0xb0] sm:$0xff]
        %v330 = vld [vmem:[%s252 + $0xb8] sm:$0xff]
        %v331 = vld [vmem:[%s252 + $0xc0] sm:$0xff]
        %v332 = vld [vmem:[%s252 + $0xc8] sm:$0xff]
        %v333 = vld [vmem:[%s252 + $0xd0] sm:$0xff]
        %v334 = vld [vmem:[%s252 + $0xd8] sm:$0xff]
        %v335 = vld [vmem:[%s252 + $0xe0] sm:$0xff]
        %v336 = vld [vmem:[%s252 + $0xe8] sm:$0xff]
        %v337 = vld [vmem:[%s252 + $0xf0] sm:$0xff]
        %v338 = vld [vmem:[%s252 + $0xf8] sm:$0xff]
        %v339 = vld [vmem:[%s252 + $0x100] sm:$0xff]
        %v340 = vld [vmem:[%s252 + $0x108] sm:$0xff]
        %v341 = vld [vmem:[%s252 + $0x110] sm:$0xff]
        %v342 = vld [vmem:[%s252 + $0x118] sm:$0xff]
        %v343 = vld [vmem:[%s252 + $0x120] sm:$0xff]
        %v344 = vld [vmem:[%s252 + $0x128] sm:$0xff]
        %v345 = vld [vmem:[%s252 + $0x130] sm:$0xff]
        %v346 = vld [vmem:[%s252 + $0x138] sm:$0xff]
        %v347 = vld [vmem:[%s252 + $0x140] sm:$0xff]
        %v348 = vld [vmem:[%s252 + $0x148] sm:$0xff]
        %v349 = vld [vmem:[%s252 + $0x150] sm:$0xff]
        %v350 = vld [vmem:[%s252 + $0x158] sm:$0xff]
        %v351 = vld [vmem:[%s252 + $0x160] sm:$0xff]
        %v352 = vld [vmem:[%s252 + $0x168] sm:$0xff]
        %v353 = vld [vmem:[%s252 + $0x170] sm:$0xff]
        %v354 = vld [vmem:[%s252 + $0x178] sm:$0xff]
        %v355 = vld [vmem:[%s252 + $0x180] sm:$0xff]
        %v356 = vld [vmem:[%s252 + $0x188] sm:$0xff]
        %v357 = vld [vmem:[%s252 + $0x190] sm:$0xff]
        %v358 = vld [vmem:[%s252 + $0x198] sm:$0xff]
        %v359 = vld [vmem:[%s252 + $0x1a0] sm:$0xff]
        %v360 = vld [vmem:[%s252 + $0x1a8] sm:$0xff]
        %v361 = vld [vmem:[%s252 + $0x1b0] sm:$0xff]
        %v362 = vld [vmem:[%s252 + $0x1b8] sm:$0xff]
        %v363 = vld [vmem:[%s252 + $0x1c0] sm:$0xff]
        %v364 = vld [vmem:[%s252 + $0x1c8] sm:$0xff]
        %v365 = vld [vmem:[%s252 + $0x1d0] sm:$0xff]
        %v366 = vld [vmem:[%s252 + $0x1d8] sm:$0xff]
        %v367 = vld [vmem:[%s252 + $0x1e0] sm:$0xff]
        %v368 = vld [vmem:[%s252 + $0x1e8] sm:$0xff]
        %v369 = vld [vmem:[%s252 + $0x1f0] sm:$0xff]
        %v370 = vld [vmem:[%s252 + $0x1f8] sm:$0xff]
        %v371 = vld [vmem:[%s252 + $0x200] sm:$0xff]
        %v372 = vld [vmem:[%s252 + $0x208] sm:$0xff]
        %v373 = vld [vmem:[%s252 + $0x210] sm:$0xff]
        %v374 = vld [vmem:[%s252 + $0x218] sm:$0xff]
        %v375 = vld [vmem:[%s252 + $0x220] sm:$0xff]
        %v376 = vld [vmem:[%s252 + $0x228] sm:$0xff]
        %v377 = vld [vmem:[%s252 + $0x230] sm:$0xff]
        %v378 = vld [vmem:[%s252 + $0x238] sm:$0xff]
        %v379 = vld [vmem:[%s252 + $0x240] sm:$0xff]
        %v380 = vld [vmem:[%s252 + $0x248] sm:$0xff]
        %v381 = vld [vmem:[%s252 + $0x250] sm:$0xff]
        %v382 = vld [vmem:[%s252 + $0x258] sm:$0xff]
        %v383 = vld [vmem:[%s252 + $0x260] sm:$0xff]
        %v384 = vld [vmem:[%s252 + $0x268] sm:$0xff]
        %v385 = vld [vmem:[%s252 + $0x270] sm:$0xff]
        %v386 = vld [vmem:[%s252 + $0x278] sm:$0xff]
        %v387 = vld [vmem:[%s252 + $0x280] sm:$0xff]
        %v388 = vld [vmem:[%s252 + $0x288] sm:$0xff]
        %v389 = vld [vmem:[%s252 + $0x290] sm:$0xff]
        %v390 = vld [vmem:[%s252 + $0x298] sm:$0xff]
        %v391 = vld [vmem:[%s252 + $0x2a0] sm:$0xff]
        %v392 = vld [vmem:[%s252 + $0x2a8] sm:$0xff]
        %v393 = vld [vmem:[%s252 + $0x2b0] sm:$0xff]
        %v394 = vld [vmem:[%s252 + $0x2b8] sm:$0xff]
        %v395 = vld [vmem:[%s252 + $0x2c0] sm:$0xff]
        %v396 = vld [vmem:[%s252 + $0x2c8] sm:$0xff]
        %v397 = vld [vmem:[%s252 + $0x2d0] sm:$0xff]
        %v398 = vld [vmem:[%s252 + $0x2d8] sm:$0xff]
        %v399 = vld [vmem:[%s252 + $0x2e0] sm:$0xff]
        %v400 = vld [vmem:[%s252 + $0x2e8] sm:$0xff]
        %v401 = vld [vmem:[%s252 + $0x2f0] sm:$0xff]
        %v402 = vld [vmem:[%s252 + $0x2f8] sm:$0xff]
        %v403 = vld [vmem:[%s252 + $0x300] sm:$0xff]
        %v404 = vld [vmem:[%s252 + $0x308] sm:$0xff]
        %v405 = vld [vmem:[%s252 + $0x310] sm:$0xff]
        %v406 = vld [vmem:[%s252 + $0x318] sm:$0xff]
        %v407 = vld [vmem:[%s252 + $0x320] sm:$0xff]
        %v408 = vld [vmem:[%s252 + $0x328] sm:$0xff]
        %v409 = vld [vmem:[%s252 + $0x330] sm:$0xff]
        %v410 = vld [vmem:[%s252 + $0x338] sm:$0xff]
        %v411 = vld [vmem:[%s252 + $0x340] sm:$0xff]
        %v412 = vld [vmem:[%s252 + $0x348] sm:$0xff]
        %v413 = vld [vmem:[%s252 + $0x350] sm:$0xff]
        %v414 = vld [vmem:[%s252 + $0x358] sm:$0xff]
        %v415 = vld [vmem:[%s252 + $0x360] sm:$0xff]
        %v416 = vld [vmem:[%s252 + $0x368] sm:$0xff]
        %v417 = vld [vmem:[%s252 + $0x370] sm:$0xff]
        %v418 = vld [vmem:[%s252 + $0x378] sm:$0xff]
        %v419 = vld [vmem:[%s252 + $0x380] sm:$0xff]
        %v420 = vld [vmem:[%s252 + $0x388] sm:$0xff]
        %v421 = vld [vmem:[%s252 + $0x390] sm:$0xff]
        %v422 = vld [vmem:[%s252 + $0x398] sm:$0xff]
        %v423 = vld [vmem:[%s252 + $0x3a0] sm:$0xff]
        %v424 = vld [vmem:[%s252 + $0x3a8] sm:$0xff]
        %v425 = vld [vmem:[%s252 + $0x3b0] sm:$0xff]
        %v426 = vld [vmem:[%s252 + $0x3b8] sm:$0xff]
        %v427 = vld [vmem:[%s252 + $0x3c0] sm:$0xff]
        %v428 = vld [vmem:[%s252 + $0x3c8] sm:$0xff]
        %v429 = vld [vmem:[%s252 + $0x3d0] sm:$0xff]
        %v430 = vld [vmem:[%s252 + $0x3d8] sm:$0xff]
        %v431 = vld [vmem:[%s252 + $0x3e0] sm:$0xff]
        %v432 = vld [vmem:[%s252 + $0x3e8] sm:$0xff]
        %v433 = vld [vmem:[%s252 + $0x3f0] sm:$0xff]
        %v434 = vld [vmem:[%s252 + $0x3f8] sm:$0xff]
        %435 = vmatpush.msra.mxu0 %v367
        %436 = vmatpush.msra.mxu0 %v363
        %437 = vmatpush.msra.mxu0 %v359
        %438 = vmatpush.msra.mxu0 %v355
        %439 = vmatpush.msra.mxu0 %v351
        %440 = vmatpush.msra.mxu0 %v347
        %441 = vmatpush.msra.mxu0 %v343
        %442 = vmatpush.msra.mxu0 %v339
        %443 = vmatpush.msra.mxu0 %v335
        %444 = vmatpush.msra.mxu0 %v331
        %445 = vmatpush.msra.mxu0 %v327
        %446 = vmatpush.msra.mxu0 %v323
        %447 = vmatpush.msra.mxu0 %v319
        %448 = vmatpush.msra.mxu0 %v315
        %449 = vmatpush.msra.mxu0 %v311
        %450 = vmatpush.msra.mxu0 %v307
        %451 = vmatmul.f32.gmra.mxu0 %v305
        %v452 = vpop.f32.mrf.mxu0
        %v453 = vadd.f32 0.0, %v452
        %454 = vdwg.mxu0
        %455 = vmatpush.msra.mxu0 %v431
        %456 = vmatpush.msra.mxu0 %v427
        %457 = vmatpush.msra.mxu0 %v423
        %458 = vmatpush.msra.mxu0 %v419
        %459 = vmatpush.msra.mxu0 %v415
        %460 = vmatpush.msra.mxu0 %v411
        %461 = vmatpush.msra.mxu0 %v407
        %462 = vmatpush.msra.mxu0 %v403
        %463 = vmatpush.msra.mxu0 %v399
        %464 = vmatpush.msra.mxu0 %v395
        %465 = vmatpush.msra.mxu0 %v391
        %466 = vmatpush.msra.mxu0 %v387
        %467 = vmatpush.msra.mxu0 %v383
        %468 = vmatpush.msra.mxu0 %v379
        %469 = vmatpush.msra.mxu0 %v375
        %470 = vmatpush.msra.mxu0 %v371
        %471 = vmatmul.f32.gmra.mxu0 %v306
        %v472 = vpop.f32.mrf.mxu0
        %v473 = vadd.f32 %v453, %v472
        %474 = vdwg.mxu0
        %475 = vmatpush.msra.mxu0 %v368
        %476 = vmatpush.msra.mxu0 %v364
        %477 = vmatpush.msra.mxu0 %v360
        %478 = vmatpush.msra.mxu0 %v356
        %479 = vmatpush.msra.mxu0 %v352
        %480 = vmatpush.msra.mxu0 %v348
        %481 = vmatpush.msra.mxu0 %v344
        %482 = vmatpush.msra.mxu0 %v340
        %483 = vmatpush.msra.mxu0 %v336
        %484 = vmatpush.msra.mxu0 %v332
        %485 = vmatpush.msra.mxu0 %v328
        %486 = vmatpush.msra.mxu0 %v324
        %487 = vmatpush.msra.mxu0 %v320
        %488 = vmatpush.msra.mxu0 %v316
        %489 = vmatpush.msra.mxu0 %v312
        %490 = vmatpush.msra.mxu0 %v308
        %491 = vmatmul.f32.gmra.mxu0 %v305
        %v492 = vpop.f32.mrf.mxu0
        %v493 = vadd.f32 0.0, %v492
        %494 = vdwg.mxu0
        %495 = vmatpush.msra.mxu0 %v432
        %496 = vmatpush.msra.mxu0 %v428
        %497 = vmatpush.msra.mxu0 %v424
        %498 = vmatpush.msra.mxu0 %v420
        %499 = vmatpush.msra.mxu0 %v416
        %500 = vmatpush.msra.mxu0 %v412
        %501 = vmatpush.msra.mxu0 %v408
        %502 = vmatpush.msra.mxu0 %v404
        %503 = vmatpush.msra.mxu0 %v400
        %504 = vmatpush.msra.mxu0 %v396
        %505 = vmatpush.msra.mxu0 %v392
        %506 = vmatpush.msra.mxu0 %v388
        %507 = vmatpush.msra.mxu0 %v384
        %508 = vmatpush.msra.mxu0 %v380
        %509 = vmatpush.msra.mxu0 %v376
        %510 = vmatpush.msra.mxu0 %v372
        %511 = vmatmul.f32.gmra.mxu0 %v306
        %v512 = vpop.f32.mrf.mxu0
        %v513 = vadd.f32 %v493, %v512
        %514 = vdwg.mxu0
        %515 = vmatpush.msra.mxu0 %v369
        %516 = vmatpush.msra.mxu0 %v365
        %517 = vmatpush.msra.mxu0 %v361
        %518 = vmatpush.msra.mxu0 %v357
        %519 = vmatpush.msra.mxu0 %v353
        %520 = vmatpush.msra.mxu0 %v349
        %521 = vmatpush.msra.mxu0 %v345
        %522 = vmatpush.msra.mxu0 %v341
        %523 = vmatpush.msra.mxu0 %v337
        %524 = vmatpush.msra.mxu0 %v333
        %525 = vmatpush.msra.mxu0 %v329
        %526 = vmatpush.msra.mxu0 %v325
        %527 = vmatpush.msra.mxu0 %v321
        %528 = vmatpush.msra.mxu0 %v317
        %529 = vmatpush.msra.mxu0 %v313
        %530 = vmatpush.msra.mxu0 %v309
        %531 = vmatmul.f32.gmra.mxu0 %v305
        %v532 = vpop.f32.mrf.mxu0
        %v533 = vadd.f32 0.0, %v532
        %534 = vdwg.mxu0
        %535 = vmatpush.msra.mxu0 %v433
        %536 = vmatpush.msra.mxu0 %v429
        %537 = vmatpush.msra.mxu0 %v425
        %538 = vmatpush.msra.mxu0 %v421
        %539 = vmatpush.msra.mxu0 %v417
        %540 = vmatpush.msra.mxu0 %v413
        %541 = vmatpush.msra.mxu0 %v409
        %542 = vmatpush.msra.mxu0 %v405
        %543 = vmatpush.msra.mxu0 %v401
        %544 = vmatpush.msra.mxu0 %v397
        %545 = vmatpush.msra.mxu0 %v393
        %546 = vmatpush.msra.mxu0 %v389
        %547 = vmatpush.msra.mxu0 %v385
        %548 = vmatpush.msra.mxu0 %v381
        %549 = vmatpush.msra.mxu0 %v377
        %550 = vmatpush.msra.mxu0 %v373
        %551 = vmatmul.f32.gmra.mxu0 %v306
        %v552 = vpop.f32.mrf.mxu0
        %v553 = vadd.f32 %v533, %v552
        %554 = vdwg.mxu0
        %555 = vmatpush.msra.mxu0 %v370
        %556 = vmatpush.msra.mxu0 %v366
        %557 = vmatpush.msra.mxu0 %v362
        %558 = vmatpush.msra.mxu0 %v358
        %559 = vmatpush.msra.mxu0 %v354
        %560 = vmatpush.msra.mxu0 %v350
        %561 = vmatpush.msra.mxu0 %v346
        %562 = vmatpush.msra.mxu0 %v342
        %563 = vmatpush.msra.mxu0 %v338
        %564 = vmatpush.msra.mxu0 %v334
        %565 = vmatpush.msra.mxu0 %v330
        %566 = vmatpush.msra.mxu0 %v326
        %567 = vmatpush.msra.mxu0 %v322
        %568 = vmatpush.msra.mxu0 %v318
        %569 = vmatpush.msra.mxu0 %v314
        %570 = vmatpush.msra.mxu0 %v310
        %571 = vmatmul.f32.gmra.mxu0 %v305
        %v572 = vpop.f32.mrf.mxu0
        %v573 = vadd.f32 0.0, %v572
        %574 = vdwg.mxu0
        %575 = vmatpush.msra.mxu0 %v434
        %576 = vmatpush.msra.mxu0 %v430
        %577 = vmatpush.msra.mxu0 %v426
        %578 = vmatpush.msra.mxu0 %v422
        %579 = vmatpush.msra.mxu0 %v418
        %580 = vmatpush.msra.mxu0 %v414
        %581 = vmatpush.msra.mxu0 %v410
        %582 = vmatpush.msra.mxu0 %v406
        %583 = vmatpush.msra.mxu0 %v402
        %584 = vmatpush.msra.mxu0 %v398
        %585 = vmatpush.msra.mxu0 %v394
        %586 = vmatpush.msra.mxu0 %v390
        %587 = vmatpush.msra.mxu0 %v386
        %588 = vmatpush.msra.mxu0 %v382
        %589 = vmatpush.msra.mxu0 %v378
        %590 = vmatpush.msra.mxu0 %v374
        %591 = vmatmul.f32.gmra.mxu0 %v306
        %v592 = vpop.f32.mrf.mxu0
        %v593 = vadd.f32 %v573, %v592
        %594 = vdwg.mxu0
        %v595 = vxor.u32 %v473, 2147483648
        %v596 = vxor.u32 %v513, 2147483648
        %v597 = vmul.f32 %v595, 1.442695
        %v598 = vpow.pop %v597
        %v599 = vmul.f32 %v596, 1.442695
        %v600 = vpow.pop %v599
        %v601 = vadd.f32 %v598, 1.0
        %v602 = vadd.f32 %v600, 1.0
        %v603 = vrcp.pop %v601
        %v604 = vmul.f32 %v601, %v603
        %v605 = vsub.f32 1.0, %v604
        %v606 = vmul.f32 %v603, %v605
        %v607 = vadd.f32 %v603, %v606
        %vm608 = vweird.f32 %v601
        %vm609 = vweird.f32 %v603
        %vm610 = vmor %vm608, %vm609
        %v611 = vsel %vm610, %v603, %v607
        %v612 = vand.u32 2147483647, %v601
        %vm613 = vcmp.eq.f32.partialorder %v612, 8.507059e+37
        %v614 = vand.u32 %v601, 2147483648
        %v615 = vor.u32 1.1754944e-38, %v614
        %v616 = vsel %vm613, %v615, %v611
        %v617 = vmul.f32 1.0, %v616
        %v618 = vrcp.pop %v602
        %v619 = vmul.f32 %v602, %v618
        %v620 = vsub.f32 1.0, %v619
        %v621 = vmul.f32 %v618, %v620
        %v622 = vadd.f32 %v618, %v621
        %vm623 = vweird.f32 %v602
        %vm624 = vweird.f32 %v618
        %vm625 = vmor %vm623, %vm624
        %v626 = vsel %vm625, %v618, %v622
        %v627 = vand.u32 2147483647, %v602
        %vm628 = vcmp.eq.f32.partialorder %v627, 8.507059e+37
        %v629 = vand.u32 %v602, 2147483648
        %v630 = vor.u32 1.1754944e-38, %v629
        %v631 = vsel %vm628, %v630, %v626
        %v632 = vmul.f32 1.0, %v631
        %v633 = vmul.f32 %v473, %v617
        %v634 = vmul.f32 %v513, %v632
        %v635 = vmul.f32 %v633, %v553
        %v636 = vmul.f32 %v634, %v593
        %v637 = vld [vmem:[#allocation2] sm:$0xff]
        %v638 = vld [vmem:[#allocation2 + $0x8] sm:$0xff]
        %v639 = vld [vmem:[%s262] sm:$0xff]
        %v640 = vld [vmem:[%s262 + $0x8] sm:$0xff]
        %v641 = vld [vmem:[%s262 + $0x10] sm:$0xff]
        %v642 = vld [vmem:[%s262 + $0x18] sm:$0xff]
        %v643 = vld [vmem:[%s262 + $0x20] sm:$0xff]
        %v644 = vld [vmem:[%s262 + $0x28] sm:$0xff]
        %v645 = vld [vmem:[%s262 + $0x30] sm:$0xff]
        %v646 = vld [vmem:[%s262 + $0x38] sm:$0xff]
        %v647 = vld [vmem:[%s262 + $0x40] sm:$0xff]
        %v648 = vld [vmem:[%s262 + $0x48] sm:$0xff]
        %v649 = vld [vmem:[%s262 + $0x50] sm:$0xff]
        %v650 = vld [vmem:[%s262 + $0x58] sm:$0xff]
        %v651 = vld [vmem:[%s262 + $0x60] sm:$0xff]
        %v652 = vld [vmem:[%s262 + $0x68] sm:$0xff]
        %v653 = vld [vmem:[%s262 + $0x70] sm:$0xff]
        %v654 = vld [vmem:[%s262 + $0x78] sm:$0xff]
        %v655 = vld [vmem:[%s262 + $0x80] sm:$0xff]
        %v656 = vld [vmem:[%s262 + $0x88] sm:$0xff]
        %v657 = vld [vmem:[%s262 + $0x90] sm:$0xff]
        %v658 = vld [vmem:[%s262 + $0x98] sm:$0xff]
        %v659 = vld [vmem:[%s262 + $0xa0] sm:$0xff]
        %v660 = vld [vmem:[%s262 + $0xa8] sm:$0xff]
        %v661 = vld [vmem:[%s262 + $0xb0] sm:$0xff]
        %v662 = vld [vmem:[%s262 + $0xb8] sm:$0xff]
        %v663 = vld [vmem:[%s262 + $0xc0] sm:$0xff]
        %v664 = vld [vmem:[%s262 + $0xc8] sm:$0xff]
        %v665 = vld [vmem:[%s262 + $0xd0] sm:$0xff]
        %v666 = vld [vmem:[%s262 + $0xd8] sm:$0xff]
        %v667 = vld [vmem:[%s262 + $0xe0] sm:$0xff]
        %v668 = vld [vmem:[%s262 + $0xe8] sm:$0xff]
        %v669 = vld [vmem:[%s262 + $0xf0] sm:$0xff]
        %v670 = vld [vmem:[%s262 + $0xf8] sm:$0xff]
        %v671 = vld [vmem:[%s262 + $0x100] sm:$0xff]
        %v672 = vld [vmem:[%s262 + $0x108] sm:$0xff]
        %v673 = vld [vmem:[%s262 + $0x110] sm:$0xff]
        %v674 = vld [vmem:[%s262 + $0x118] sm:$0xff]
        %v675 = vld [vmem:[%s262 + $0x120] sm:$0xff]
        %v676 = vld [vmem:[%s262 + $0x128] sm:$0xff]
        %v677 = vld [vmem:[%s262 + $0x130] sm:$0xff]
        %v678 = vld [vmem:[%s262 + $0x138] sm:$0xff]
        %v679 = vld [vmem:[%s262 + $0x140] sm:$0xff]
        %v680 = vld [vmem:[%s262 + $0x148] sm:$0xff]
        %v681 = vld [vmem:[%s262 + $0x150] sm:$0xff]
        %v682 = vld [vmem:[%s262 + $0x158] sm:$0xff]
        %v683 = vld [vmem:[%s262 + $0x160] sm:$0xff]
        %v684 = vld [vmem:[%s262 + $0x168] sm:$0xff]
        %v685 = vld [vmem:[%s262 + $0x170] sm:$0xff]
        %v686 = vld [vmem:[%s262 + $0x178] sm:$0xff]
        %v687 = vld [vmem:[%s262 + $0x180] sm:$0xff]
        %v688 = vld [vmem:[%s262 + $0x188] sm:$0xff]
        %v689 = vld [vmem:[%s262 + $0x190] sm:$0xff]
        %v690 = vld [vmem:[%s262 + $0x198] sm:$0xff]
        %v691 = vld [vmem:[%s262 + $0x1a0] sm:$0xff]
        %v692 = vld [vmem:[%s262 + $0x1a8] sm:$0xff]
        %v693 = vld [vmem:[%s262 + $0x1b0] sm:$0xff]
        %v694 = vld [vmem:[%s262 + $0x1b8] sm:$0xff]
        %v695 = vld [vmem:[%s262 + $0x1c0] sm:$0xff]
        %v696 = vld [vmem:[%s262 + $0x1c8] sm:$0xff]
        %v697 = vld [vmem:[%s262 + $0x1d0] sm:$0xff]
        %v698 = vld [vmem:[%s262 + $0x1d8] sm:$0xff]
        %v699 = vld [vmem:[%s262 + $0x1e0] sm:$0xff]
        %v700 = vld [vmem:[%s262 + $0x1e8] sm:$0xff]
        %v701 = vld [vmem:[%s262 + $0x1f0] sm:$0xff]
        %v702 = vld [vmem:[%s262 + $0x1f8] sm:$0xff]
        %703 = vmatpush.msra.mxu0 %v669
        %704 = vmatpush.msra.mxu0 %v667
        %705 = vmatpush.msra.mxu0 %v665
        %706 = vmatpush.msra.mxu0 %v663
        %707 = vmatpush.msra.mxu0 %v661
        %708 = vmatpush.msra.mxu0 %v659
        %709 = vmatpush.msra.mxu0 %v657
        %710 = vmatpush.msra.mxu0 %v655
        %711 = vmatpush.msra.mxu0 %v653
        %712 = vmatpush.msra.mxu0 %v651
        %713 = vmatpush.msra.mxu0 %v649
        %714 = vmatpush.msra.mxu0 %v647
        %715 = vmatpush.msra.mxu0 %v645
        %716 = vmatpush.msra.mxu0 %v643
        %717 = vmatpush.msra.mxu0 %v641
        %718 = vmatpush.msra.mxu0 %v639
        %719 = vmatmul.f32.gmra.mxu0 %v635
        %v720 = vpop.f32.mrf.mxu0
        %v721 = vadd.f32 0.0, %v720
        %722 = vdwg.mxu0
        %723 = vmatpush.msra.mxu0 %v701
        %724 = vmatpush.msra.mxu0 %v699
        %725 = vmatpush.msra.mxu0 %v697
        %726 = vmatpush.msra.mxu0 %v695
        %727 = vmatpush.msra.mxu0 %v693
        %728 = vmatpush.msra.mxu0 %v691
        %729 = vmatpush.msra.mxu0 %v689
        %730 = vmatpush.msra.mxu0 %v687
        %731 = vmatpush.msra.mxu0 %v685
        %732 = vmatpush.msra.mxu0 %v683
        %733 = vmatpush.msra.mxu0 %v681
        %734 = vmatpush.msra.mxu0 %v679
        %735 = vmatpush.msra.mxu0 %v677
        %736 = vmatpush.msra.mxu0 %v675
        %737 = vmatpush.msra.mxu0 %v673
        %738 = vmatpush.msra.mxu0 %v671
        %739 = vmatmul.f32.gmra.mxu0 %v636
        %v740 = vpop.f32.mrf.mxu0
        %v741 = vadd.f32 %v721, %v740
        %742 = vdwg.mxu0
        %743 = vmatpush.msra.mxu0 %v670
        %744 = vmatpush.msra.mxu0 %v668
        %745 = vmatpush.msra.mxu0 %v666
        %746 = vmatpush.msra.mxu0 %v664
        %747 = vmatpush.msra.mxu0 %v662
        %748 = vmatpush.msra.mxu0 %v660
        %749 = vmatpush.msra.mxu0 %v658
        %750 = vmatpush.msra.mxu0 %v656
        %751 = vmatpush.msra.mxu0 %v654
        %752 = vmatpush.msra.mxu0 %v652
        %753 = vmatpush.msra.mxu0 %v650
        %754 = vmatpush.msra.mxu0 %v648
        %755 = vmatpush.msra.mxu0 %v646
        %756 = vmatpush.msra.mxu0 %v644
        %757 = vmatpush.msra.mxu0 %v642
        %758 = vmatpush.msra.mxu0 %v640
        %759 = vmatmul.f32.gmra.mxu0 %v635
        %v760 = vpop.f32.mrf.mxu0
        %v761 = vadd.f32 0.0, %v760
        %762 = vdwg.mxu0
        %763 = vmatpush.msra.mxu0 %v702
        %764 = vmatpush.msra.mxu0 %v700
        %765 = vmatpush.msra.mxu0 %v698
        %766 = vmatpush.msra.mxu0 %v696
        %767 = vmatpush.msra.mxu0 %v694
        %768 = vmatpush.msra.mxu0 %v692
        %769 = vmatpush.msra.mxu0 %v690
        %770 = vmatpush.msra.mxu0 %v688
        %771 = vmatpush.msra.mxu0 %v686
        %772 = vmatpush.msra.mxu0 %v684
        %773 = vmatpush.msra.mxu0 %v682
        %774 = vmatpush.msra.mxu0 %v680
        %775 = vmatpush.msra.mxu0 %v678
        %776 = vmatpush.msra.mxu0 %v676
        %777 = vmatpush.msra.mxu0 %v674
        %778 = vmatpush.msra.mxu0 %v672
        %779 = vmatmul.f32.gmra.mxu0 %v636
        %v780 = vpop.f32.mrf.mxu0
        %v781 = vadd.f32 %v761, %v780
        %782 = vdwg.mxu0
        %v783 = vadd.f32 %v637, %v741
        %v784 = vadd.f32 %v638, %v781
        %785 = vst [vmem:[#allocation2] sm:$0xff] %v783
        %786 = vst [vmem:[#allocation2 + $0x8] sm:$0xff] %v784
        %p787 = scmp.eq.s32.totalorder %s30, 1
        // Predicated region
        $region49: #{tpu_custom_call.1} parent=31 // pred_check
          %p788 = pneg %p787
        $region50: #{tpu_custom_call.1} parent=31 // pred_check_branch
          %790 = sbr.rel (%p788) target = $region52
        $region51: #{tpu_custom_call.1} parent=31 // pred_region
          %v791 = vld [vmem:[#allocation2] sm:$0xff]
          %v792 = vld [vmem:[#allocation2 + $0x8] sm:$0xff]
          %793 = vst [vmem:[%s295] sm:$0xff] %v791
          %794 = vst [vmem:[%s295 + $0x8] sm:$0xff] %v792
        $region52: #{tpu_custom_call.1} parent=31 // pred_fallthru
          _
        %s795 = sand.u32 %s132, 1
        %s796 = scalar_lea.sflag [#allocation5], %s795
        %s797 = sand.u32 %s132, 1
        %s798 = smul.addr %s797, 16
        %s799 = scalar_lea.vmem [#allocation9], %s798
        // Predicated region
        $region53: #{tpu_custom_call.1} parent=31 // pred_check
          %p800 = pneg %p142
        $region54: #{tpu_custom_call.1} parent=31 // pred_check_branch
          %802 = sbr.rel (%p800) target = $region56
        $region55: #{tpu_custom_call.1} parent=31 // pred_region
          %s803 = smul.u32 2, %s29
          %805 = vsyncadd %s796, 0
          %s806 = smul.addr %s28, 2
          %s807 = sadd.s32 %s803, %s806
          %s808 = smul.addr %s807, 8
          %s809 = scalar_lea.hbm %s3, %s808
          %s811 = sshll.u32 %s799, 4
          %s812 = int_to_ptr.vmem [resolvable:$true] %s811
          %s813 = sshll.u32 %s809, 4
          %s814 = int_to_ptr.hbm [resolvable:$true] %s813
          %816 = dma.vmem_to_hbm [thread:$0]  %s812, 256, %s814, %s796
        $region56: #{tpu_custom_call.1} parent=31 // pred_fallthru
          _
      $region32: #{tpu_custom_call.1} parent=5 // pred_fallthru
        _
      %p817 = scmp.le.s32.totalorder 2, %s18
      // Predicated region
      $region57: #{tpu_custom_call.1} parent=5 // pred_check
        %p818 = pneg %p817
      $region58: #{tpu_custom_call.1} parent=5 // pred_check_branch
        %820 = sbr.rel (%p818) target = $region60
      $region59: #{tpu_custom_call.1} parent=5 // pred_region
        %s821 = ssub.s32 %s18, 2
        // Predicated region
        $region61: #{tpu_custom_call.1} parent=59 // pred_check
          %p822 = pneg %p148
        $region62: #{tpu_custom_call.1} parent=59 // pred_check_branch
          %824 = sbr.rel (%p822) target = $region64
        $region63: #{tpu_custom_call.1} parent=59 // pred_region
          %s825 = sand.u32 %s133, 1
          %s826 = scalar_lea.sflag [#allocation5], %s825
          %s827 = sand.u32 %s133, 1
          %s828 = smul.addr %s827, 16
          %s829 = scalar_lea.vmem [#allocation9], %s828
          %831 = dma.done %s826, 256
        $region64: #{tpu_custom_call.1} parent=59 // pred_fallthru
          _
      $region60: #{tpu_custom_call.1} parent=5 // pred_fallthru
        _
    $region6: #{tpu_custom_call.1} parent=1 // loop_footer
      %s22 = sadd.s32 1, %s18
    $region7: #{tpu_custom_call.1} parent=1 // loop_footer_branch
      %17 = sbr.rel target = $region3
    $region8: #{tpu_custom_call.1} parent=1 // loop_exit
      _
    %832 = vsyncpa [#allocation4], 1
    %s833 = scalar_lea.sflag [#allocation4], 1
    %834 = vsyncpa %s833, 1
    %835 = vsyncpa [#allocation7], 1
    %s836 = scalar_lea.sflag [#allocation7], 1
    %837 = vsyncpa %s836, 1
    %838 = vsyncpa [#allocation5], 1
    %s839 = scalar_lea.sflag [#allocation5], 1
    %840 = vsyncpa %s839, 1

</llo_original>
